<compile_context>
chip_gen: v7x
topology: tpu7x:2x2x1
jax: 0.10.0
libtpu: 0.0.40
codegen_flags: <defaults>
</compile_context>

<pallas_src>
import functools

import jax
import jax.numpy as jnp
from jax.experimental import pallas as pl
from jax.experimental.pallas import tpu as pltpu

_LANES = 128
_BLOCK_ROWS = 4096  # (4096, 128) f32 block = 2 MiB per input per grid step.


def _round_up(x, m):
    return (x + m - 1) // m * m


# ---------------------------------------------------------------------------
# Kernels
# ---------------------------------------------------------------------------
def _rr_partial_kernel(pred_ref, trg_ref, out_ref, *, rows, block_rows):
    """Per-block partial sum of (pred - trg)/trg written as an (8,128) slab.

    The grid axis is 'parallel' (each step owns its own output block), so the
    reduction is two-stage and megacore (v7x) can shard blocks across cores.
    """
    p = pred_ref[...].astype(jnp.float32)
    t = trg_ref[...].astype(jnp.float32)
    loss = (p - t) / t  # exact divide -> parity with the PyTorch reference

    if rows % block_rows != 0:
        # Ragged last block (or block taller than the whole array): zero the
        # contribution of out-of-bounds rows.  `rows`/`block_rows` are static.
        row0 = pl.program_id(0) * block_rows
        rid = jax.lax.broadcasted_iota(jnp.int32, loss.shape, 0) + row0
        loss = jnp.where(rid < rows, loss, 0.0)

    # (block_rows, 128) -> (8, 128) using pure VALU adds (block_rows % 8 == 0);
    # the final cross-lane/sublane reduce happens once in the wrapper.
    partial = loss.reshape(block_rows // 8, 8, _LANES).sum(axis=0)
    out_ref[...] = partial.reshape(1, 8, _LANES)


def _rr_elem_kernel(pred_ref, trg_ref, out_ref):
    """Elementwise (pred - trg)/trg for reduction='none'."""
    p = pred_ref[...].astype(jnp.float32)
    t = trg_ref[...].astype(jnp.float32)
    out_ref[...] = ((p - t) / t).astype(out_ref.dtype)


# ---------------------------------------------------------------------------
# Wrapper
# ---------------------------------------------------------------------------
def _to_slab(x):
    """Flatten to a lane-dense (rows, 128) slab.

    Zero-copy (pure reshape) when numel % 128 == 0.  Otherwise the flat tail
    is padded with 1s up to the next multiple of 128 (pred=trg=1 keeps the
    padded loss finite; the kernels mask / the wrapper slices it away).
    """
    flat = x.reshape(-1)
    n = flat.shape[0]
    pad = (-n) % _LANES
    if pad:
        # TODO(synk): this branch copies the flat array once; only hit when
        # numel is not a multiple of 128.
        flat = jnp.concatenate([flat, jnp.full((pad,), 1, dtype=flat.dtype)])
    return flat.reshape(-1, _LANES), n


def loss6_rr(pred, trg, reduction="mean"):
    """JAX/Pallas equivalent of Loss6.forward(pred, trg)."""
    assert pred.shape == trg.shape
    orig_shape = pred.shape
    out_dtype = jnp.promote_types(pred.dtype, trg.dtype)

    pred2d, n = _to_slab(pred)
    trg2d, _ = _to_slab(trg)
    rows = pred2d.shape[0]
    block_rows = min(_BLOCK_ROWS, _round_up(rows, 8))  # always a multiple of 8
    num_blocks = pl.cdiv(rows, block_rows)
    in_bytes = pred2d.dtype.itemsize + trg2d.dtype.itemsize

    in_specs = [
        pl.BlockSpec((block_rows, _LANES), lambda i: (i, 0)),
        pl.BlockSpec((block_rows, _LANES), lambda i: (i, 0)),
    ]

    if reduction == "none":
        out2d = pl.pallas_call(
            _rr_elem_kernel,
            out_shape=jax.ShapeDtypeStruct((rows, _LANES), out_dtype),
            grid_spec=pltpu.PrefetchScalarGridSpec(
                num_scalar_prefetch=0,
                grid=(num_blocks,),
                in_specs=in_specs,
                out_specs=pl.BlockSpec((block_rows, _LANES), lambda i: (i, 0)),
            ),
            compiler_params=pltpu.CompilerParams(
                dimension_semantics=("parallel",)),
            cost_estimate=pl.CostEstimate(
                flops=2 * n, transcendentals=0,
                bytes_accessed=n * in_bytes
                + n * jnp.dtype(out_dtype).itemsize),
        )(pred2d, trg2d)
        if rows * _LANES == n:
            return out2d.reshape(orig_shape)  # common case: no slice copy
        return out2d.reshape(-1)[:n].reshape(orig_shape)

    # 'sum' / 'mean': stage 1 -> per-block (8, 128) partial sums over a
    # 'parallel' grid; stage 2 -> tiny jnp.sum over the partials.
    partials = pl.pallas_call(
        functools.partial(_rr_partial_kernel, rows=rows, block_rows=block_rows),
        out_shape=jax.ShapeDtypeStruct((num_blocks, 8, _LANES), jnp.float32),
        grid_spec=pltpu.PrefetchScalarGridSpec(
            num_scalar_prefetch=0,
            grid=(num_blocks,),
            in_specs=in_specs,
            out_specs=pl.BlockSpec((1, 8, _LANES), lambda i: (i, 0, 0)),
        ),
        compiler_params=pltpu.CompilerParams(
            dimension_semantics=("parallel",)),
        cost_estimate=pl.CostEstimate(
            flops=3 * n, transcendentals=0,
            bytes_accessed=n * in_bytes + num_blocks * 8 * _LANES * 4),
    )(pred2d, trg2d)

    total = jnp.sum(partials, dtype=jnp.float32)
    if reduction == "sum":
        return total.astype(out_dtype)
    # default: 'mean'
    return (total / jnp.float32(n)).astype(out_dtype)


# ---------------------------------------------------------------------------
if __name__ == "__main__":
    key = jax.random.PRNGKey(0)
    k1, k2 = jax.random.split(key)
    # Small NCHW-like shapes consistent with a regression target pair.
    shape = (2, 4, 16, 16)
    pred = jax.random.normal(k1, shape, dtype=jnp.float32)
    # keep targets away from 0 so the reference division is well-conditioned
    trg = jax.random.normal(k2, shape, dtype=jnp.float32) + 3.0

    out_mean = jax.block_until_ready(loss6_rr(pred, trg, reduction="mean"))
    out_sum = jax.block_until_ready(loss6_rr(pred, trg, reduction="sum"))
    out_none = jax.block_until_ready(loss6_rr(pred, trg, reduction="none"))

    ref_none = (pred - trg) / trg
    assert out_none.shape == shape and out_none.dtype == pred.dtype
    assert jnp.allclose(out_none, ref_none, atol=1e-5, rtol=1e-5)
    assert jnp.allclose(out_sum, ref_none.sum(), atol=1e-3, rtol=1e-5)
    assert jnp.allclose(out_mean, ref_none.mean(), atol=1e-6, rtol=1e-5)

    print("KERNEL_OK")
</pallas_src>

<mosaic_0001>
module attributes {stable_mosaic.version = 11 : i64} {
  func.func @_rr_partial_kernel(%arg0: i32, %arg1: memref<16x128xf32, #tpu.memory_space<vmem>>, %arg2: memref<16x128xf32, #tpu.memory_space<vmem>>, %arg3: memref<1x8x128xf32, #tpu.memory_space<vmem>>) attributes {dimension_semantics = [#tpu.dimension_semantics<parallel>], iteration_bounds = array<i64: 1>, scalar_prefetch = 0 : i64, scratch_operands = 0 : i64, tpu.core_type = #tpu.core_type<tc>, window_params = [{transform_indices = @transform_0, window_bounds = array<i64: 16, 128>}, {transform_indices = @transform_1, window_bounds = array<i64: 16, 128>}, {transform_indices = @transform_2, window_bounds = array<i64: 1, 8, 128>}]} {
    %c0 = arith.constant 0 : index
    %c0_0 = arith.constant 0 : index
    %0 = vector.load %arg1[%c0, %c0_0] : memref<16x128xf32, #tpu.memory_space<vmem>>, vector<16x128xf32>
    %c0_1 = arith.constant 0 : index
    %c0_2 = arith.constant 0 : index
    %1 = vector.load %arg2[%c0_1, %c0_2] : memref<16x128xf32, #tpu.memory_space<vmem>>, vector<16x128xf32>
    %2 = arith.subf %0, %1 : vector<16x128xf32>
    %3 = arith.divf %2, %1 : vector<16x128xf32>
    %4 = vector.shape_cast %3 : vector<16x128xf32> to vector<2x8x128xf32>
    %cst = arith.constant dense<0.000000e+00> : vector<8x128xf32>
    %5 = vector.multi_reduction <add>, %4, %cst [0] : vector<2x8x128xf32> to vector<8x128xf32>
    %6 = vector.shape_cast %5 : vector<8x128xf32> to vector<1x8x128xf32>
    %c0_3 = arith.constant 0 : index
    %c0_4 = arith.constant 0 : index
    %c0_5 = arith.constant 0 : index
    %7 = vector.load %arg3[%c0_3, %c0_4, %c0_5] : memref<1x8x128xf32, #tpu.memory_space<vmem>>, vector<1x8x128xf32>
    tpu.vector_store %arg3[%c0_3, %c0_4, %c0_5], %6 {strides = array<i32>} : memref<1x8x128xf32, #tpu.memory_space<vmem>>, vector<1x8x128xf32>,
    return
  }
  func.func @transform_0(%arg0: i32) -> (i32, i32) {
    %c0_i32 = arith.constant 0 : i32
    %c0_i32_0 = arith.constant 0 : i32
    return %arg0, %c0_i32 : i32, i32
  }
  func.func @transform_1(%arg0: i32) -> (i32, i32) {
    %c0_i32 = arith.constant 0 : i32
    %c0_i32_0 = arith.constant 0 : i32
    return %arg0, %c0_i32 : i32, i32
  }
  func.func @transform_2(%arg0: i32) -> (i32, i32, i32) {
    %c0_i32 = arith.constant 0 : i32
    %c0_i32_0 = arith.constant 0 : i32
    %c0_i32_1 = arith.constant 0 : i32
    return %arg0, %c0_i32, %c0_i32_0 : i32, i32, i32
  }
}

</mosaic_0001>

<llo_original>
// kernel: tpu_custom_call.1
$region0: #{tpu_custom_call.1}
  #allocation0 [shape = 'u32[]', space=smem, size = 0x4, offset = 0x4, fixed_abs, tag = 'smem constant byte address 0x4 - core index']
  #allocation1 [shape = 'u32[144,128]{1,0:T(1,128)}', space=vmem, size = 0x12000, scoped, tag = 'internal scratch']
  %s0 = inlined_call_operand.hbm [shape: f32[16,128], index: 0, kind: input, shape index: {}]
  %s1 = inlined_call_operand.hbm [shape: f32[16,128], index: 1, kind: input, shape index: {}]
  %s2 = inlined_call_operand.hbm [shape: f32[1,8,128], index: 2, kind: output, shape index: {}]
  %s3 = sld [smem:[#allocation0]]
  $region26: #{tpu_custom_call.1} parent=0
    _
  %s5 = ssub.s32 1, %s3
  %s6 = scalar_select 0, %s5, %s3
  $region1: #{tpu_custom_call.1} parent=0
    #allocation2 [shape = 'u8[8192]{0}', space=vmem, size = 0x2000, scoped, tag = 'input window, operand 0, single buffered']
    #allocation3 [shape = 's32[1]{0}', space=sflag, size = 0x4, scoped, tag = 'scoped memory for tpu_custom_call.1']
    #allocation4 [shape = 's32[1]{0}', space=sflag, size = 0x4, scoped, tag = 'scoped memory for tpu_custom_call.1']
    #allocation5 [shape = 'u8[8192]{0}', space=vmem, size = 0x2000, scoped, tag = 'input window, operand 1, single buffered']
    #allocation6 [shape = 's32[1]{0}', space=sflag, size = 0x4, scoped, tag = 'scoped memory for tpu_custom_call.1']
    #allocation7 [shape = 'u8[4096]{0}', space=vmem, size = 0x1000, scoped, tag = 'output window, operand 0, single buffered']
    %7 = vsyncpa [#allocation3], 0
    %8 = vsyncpa [#allocation6], 0
    %9 = vsyncpa [#allocation4], 0
    // Predicated region
    $region2: #{tpu_custom_call.1} parent=1 // pred_check
      _
    $region3: #{tpu_custom_call.1} parent=1 // pred_check_branch
      %11 = sbr.rel (0) target = $region5
    $region4: #{tpu_custom_call.1} parent=1 // pred_region
      %s13 = ssub.s32 256, 256
      %14 = vsyncadd [#allocation3], %s13
      %s15 = sshll.u32 [#allocation2], 4
      %s16 = int_to_ptr.vmem [resolvable:$true] %s15
      %21 = dma.hbm_to_vmem [thread:$0]  %s0, 256, %s16, [#allocation3], 128, 128, 8
    $region5: #{tpu_custom_call.1} parent=1 // pred_fallthru
      _
    // Predicated region
    $region6: #{tpu_custom_call.1} parent=1 // pred_check
      _
    $region7: #{tpu_custom_call.1} parent=1 // pred_check_branch
      %23 = sbr.rel (0) target = $region9
    $region8: #{tpu_custom_call.1} parent=1 // pred_region
      %s25 = ssub.s32 256, 256
      %26 = vsyncadd [#allocation6], %s25
      %s27 = sshll.u32 [#allocation5], 4
      %s28 = int_to_ptr.vmem [resolvable:$true] %s27
      %33 = dma.hbm_to_vmem [thread:$0]  %s1, 256, %s28, [#allocation6], 128, 128, 8
    $region9: #{tpu_custom_call.1} parent=1 // pred_fallthru
      _
    // Predicated region
    $region10: #{tpu_custom_call.1} parent=1 // pred_check
      _
    $region11: #{tpu_custom_call.1} parent=1 // pred_check_branch
      %35 = sbr.rel (0) target = $region13
    $region12: #{tpu_custom_call.1} parent=1 // pred_region
      %36 = dma.done [#allocation3], 256
    $region13: #{tpu_custom_call.1} parent=1 // pred_fallthru
      _
    // Predicated region
    $region14: #{tpu_custom_call.1} parent=1 // pred_check
      _
    $region15: #{tpu_custom_call.1} parent=1 // pred_check_branch
      %38 = sbr.rel (0) target = $region17
    $region16: #{tpu_custom_call.1} parent=1 // pred_region
      %39 = dma.done [#allocation6], 256
    $region17: #{tpu_custom_call.1} parent=1 // pred_fallthru
      _
    %v40 = vld [vmem:[#allocation2] sm:$0xff]
    %v41 = vld [vmem:[#allocation2 + $0x8] sm:$0xff]
    %v42 = vld [vmem:[#allocation5] sm:$0xff]
    %v43 = vld [vmem:[#allocation5 + $0x8] sm:$0xff]
    %v44 = vsub.f32 %v40, %v42
    %v45 = vsub.f32 %v41, %v43
    %v46 = vrcp.pop %v42
    %v47 = vmul.f32 %v44, %v46
    %v48 = vrcp.pop %v43
    %v49 = vmul.f32 %v45, %v48
    %v50 = vadd.f32 %v47, %v49
    %51 = vst [vmem:[#allocation7] sm:$0xff] %v50
    // Predicated region
    $region18: #{tpu_custom_call.1} parent=1 // pred_check
      _
    $region19: #{tpu_custom_call.1} parent=1 // pred_check_branch
      %53 = sbr.rel (0) target = $region21
    $region20: #{tpu_custom_call.1} parent=1 // pred_region
      %s55 = ssub.s32 128, 128
      %56 = vsyncadd [#allocation4], %s55
      %s58 = sshll.u32 [#allocation7], 4
      %s59 = int_to_ptr.vmem [resolvable:$true] %s58
      %61 = dma.vmem_to_hbm [thread:$0]  %s59, 128, %s2, [#allocation4]
    $region21: #{tpu_custom_call.1} parent=1 // pred_fallthru
      _
    // Predicated region
    $region22: #{tpu_custom_call.1} parent=1 // pred_check
      _
    $region23: #{tpu_custom_call.1} parent=1 // pred_check_branch
      %63 = sbr.rel (0) target = $region25
    $region24: #{tpu_custom_call.1} parent=1 // pred_region
      %64 = dma.done [#allocation4], 128
    $region25: #{tpu_custom_call.1} parent=1 // pred_fallthru
      _
    %65 = vsyncpa [#allocation3], 1
    %66 = vsyncpa [#allocation6], 1
    %67 = vsyncpa [#allocation4], 1

</llo_original>
